<compile_context>
chip_gen: v6e
topology: v6e:2x2x1
jax: 0.10.0
libtpu: 0.0.40
codegen_flags: <defaults>
</compile_context>

<pallas_src>
import math

import jax
import jax.numpy as jnp
from jax.experimental import pallas as pl
from jax.experimental.pallas import tpu as pltpu

_DEFAULT_BLOCK_ROWS = 4096  # 8 MiB f32 blocks at 512 lanes


def _make_cosine_cutoff_kernel(cutoff: float):
    # Plain Python floats: folded as constants, NOT captured jax arrays.
    half_inv = 0.5 * math.pi / float(cutoff)
    rc = float(cutoff)

    def kernel(x_ref, o_ref):
        # Compute in f32 (v5e VPU/EUP lack a bf16 path); cast back on store.
        x = x_ref[...].astype(jnp.float32)
        # Half-angle identity: 0.5 * (1 + cos(t)) == cos(t/2)**2
        c = jnp.cos(x * half_inv)
        out = c * c
        o_ref[...] = jnp.where(x <= rc, out, 0.0).astype(o_ref.dtype)

    return kernel


def _round_up(n: int, m: int) -> int:
    return ((n + m - 1) // m) * m


def _sublane(dtype) -> int:
    return {4: 8, 2: 16, 1: 32}.get(jnp.dtype(dtype).itemsize, 8)


def cosine_cutoff(x: jax.Array, cutoff: float = 10.0,
                  block_rows: int = _DEFAULT_BLOCK_ROWS) -> jax.Array:
    """Apply the cosine cutoff elementwise on an arbitrary-shaped float array."""
    orig_shape = x.shape
    dtype = x.dtype
    n = x.size
    itemsize = jnp.dtype(dtype).itemsize

    # Widest lane-dense column count that divides n exactly -> no pad, no slice
    # for the common 128-aligned case.
    cols = None
    for c in (512, 256, 128):
        if n % c == 0:
            cols = c
            break
    if cols is None:
        cols = 512

    rows = -(-n // cols)            # ceil
    flat = x.reshape(-1)            # contiguous flatten: no copy
    pad = rows * cols - n
    if pad:                         # only for non-128-aligned element counts
        flat = jnp.pad(flat, (0, pad))
    x2d = flat.reshape(rows, cols)

    sub = _sublane(dtype)
    if rows <= block_rows:
        tile_rows = rows            # single block == full array dims (always legal)
    else:
        tile_rows = _round_up(min(block_rows, rows), sub)
    grid = (pl.cdiv(rows, tile_rows),)

    block_bytes = tile_rows * cols * itemsize
    # Double-buffered in + out blocks, plus headroom; capped well below v7x's
    # 64 MiB physical VMEM (worst case 4 * 8 MiB + 8 MiB = 40 MiB).
    vmem_limit = min(max(4 * block_bytes + (8 << 20), 16 << 20), 48 << 20)

    n_eff = rows * cols
    cost = pl.CostEstimate(flops=5 * n_eff,
                           transcendentals=n_eff,
                           bytes_accessed=2 * n_eff * itemsize)

    y2d = pl.pallas_call(
        _make_cosine_cutoff_kernel(cutoff),
        out_shape=jax.ShapeDtypeStruct((rows, cols), dtype),
        grid_spec=pltpu.PrefetchScalarGridSpec(
            num_scalar_prefetch=0,
            grid=grid,
            in_specs=[pl.BlockSpec((tile_rows, cols), lambda i: (i, 0))],
            out_specs=pl.BlockSpec((tile_rows, cols), lambda i: (i, 0)),
        ),
        compiler_params=pltpu.CompilerParams(
            dimension_semantics=("parallel",),
            vmem_limit_bytes=vmem_limit,
        ),
        cost_estimate=cost,
    )(x2d)

    out = y2d.reshape(-1)
    if pad:
        out = out[:n]
    return out.reshape(orig_shape)


def cosine_cutoff_ref(x: jax.Array, cutoff: float = 10.0) -> jax.Array:
    out = 0.5 * (1.0 + jnp.cos(jnp.pi * x / cutoff))
    mask = (x <= cutoff).astype(x.dtype)
    return out * mask


if __name__ == "__main__":
    key = jax.random.PRNGKey(0)
    cutoff = 10.0
    k1, k2, k3, k4 = jax.random.split(key, 4)

    def check(y, x, name):
        y_ref = cosine_cutoff_ref(x, cutoff)
        assert y.shape == x.shape and y.dtype == x.dtype, name
        assert jnp.allclose(y, y_ref, atol=1e-5, rtol=1e-5), name

    # Small shape consistent with the module's usage (distance tensor);
    # 128-aligned element count -> no pad, no slice, single block.
    x_small = jax.random.uniform(k1, (2, 4, 16, 16), dtype=jnp.float32) * 15.0
    check(jax.block_until_ready(cosine_cutoff(x_small, cutoff)), x_small, "small")

    # Larger aligned shape, default (single big block) path.
    x_big = jax.random.uniform(k2, (2048, 640), dtype=jnp.float32) * 15.0
    check(jax.block_until_ready(cosine_cutoff(x_big, cutoff)), x_big, "big")

    # Same data with a small block to exercise the multi-step grid.
    check(jax.block_until_ready(cosine_cutoff(x_big, cutoff, block_rows=256)),
          x_big, "big_grid")

    # Ragged last block (rows=125 not a multiple of block_rows=32).
    x_rag = jax.random.uniform(k3, (100, 640), dtype=jnp.float32) * 15.0
    check(jax.block_until_ready(cosine_cutoff(x_rag, cutoff, block_rows=32)),
          x_rag, "ragged")

    # Non-128-aligned element count -> exercises the pad + tail-slice path.
    x_odd = jax.random.uniform(k4, (37, 19), dtype=jnp.float32) * 15.0
    check(jax.block_until_ready(cosine_cutoff(x_odd, cutoff)), x_odd, "odd")

    print("KERNEL_OK")
</pallas_src>

<mosaic_0001>
module attributes {stable_mosaic.version = 11 : i64} {
  func.func @kernel(%arg0: i32, %arg1: memref<4x512xf32, #tpu.memory_space<vmem>>, %arg2: memref<4x512xf32, #tpu.memory_space<vmem>>) attributes {dimension_semantics = [#tpu.dimension_semantics<parallel>], iteration_bounds = array<i64: 1>, scalar_prefetch = 0 : i64, scratch_operands = 0 : i64, tpu.core_type = #tpu.core_type<tc>, window_params = [{transform_indices = @transform_0, window_bounds = array<i64: 4, 512>}, {transform_indices = @transform_1, window_bounds = array<i64: 4, 512>}]} {
    %c0 = arith.constant 0 : index
    %c0_0 = arith.constant 0 : index
    %0 = vector.load %arg1[%c0, %c0_0] : memref<4x512xf32, #tpu.memory_space<vmem>>, vector<4x512xf32>
    %cst = arith.constant 0.157079637 : f32
    %1 = vector.broadcast %cst : f32 to vector<4x512xf32>
    %2 = arith.mulf %0, %1 : vector<4x512xf32>
    %3 = math.cos %2 : vector<4x512xf32>
    %4 = arith.mulf %3, %3 : vector<4x512xf32>
    %cst_1 = arith.constant 1.000000e+01 : f32
    %5 = vector.broadcast %cst_1 : f32 to vector<4x512xf32>
    %6 = arith.cmpf ole, %0, %5 : vector<4x512xf32>
    %cst_2 = arith.constant 0.000000e+00 : f32
    %7 = vector.broadcast %cst_2 : f32 to vector<4x512xf32>
    %8 = arith.select %6, %4, %7 : vector<4x512xi1>, vector<4x512xf32>
    %c0_3 = arith.constant 0 : index
    %c0_4 = arith.constant 0 : index
    %9 = vector.load %arg2[%c0_3, %c0_4] : memref<4x512xf32, #tpu.memory_space<vmem>>, vector<4x512xf32>
    tpu.vector_store %arg2[%c0_3, %c0_4], %8 {strides = array<i32>} : memref<4x512xf32, #tpu.memory_space<vmem>>, vector<4x512xf32>,
    return
  }
  func.func @transform_0(%arg0: i32) -> (i32, i32) {
    %c0_i32 = arith.constant 0 : i32
    %c0_i32_0 = arith.constant 0 : i32
    return %arg0, %c0_i32 : i32, i32
  }
  func.func @transform_1(%arg0: i32) -> (i32, i32) {
    %c0_i32 = arith.constant 0 : i32
    %c0_i32_0 = arith.constant 0 : i32
    return %arg0, %c0_i32 : i32, i32
  }
}

</mosaic_0001>

<llo_original>
// kernel: tpu_custom_call.1
$region0: #{tpu_custom_call.1}
  #allocation0 [shape = 'u32[]', space=smem, size = 0x4, offset = 0x4, fixed_abs, tag = 'smem constant byte address 0x4 - core index']
  #allocation1 [shape = 'u32[144,128]{1,0:T(1,128)}', space=vmem, size = 0x12000, scoped, tag = 'internal scratch']
  %s0 = inlined_call_operand.hbm [shape: f32[4,512], index: 0, kind: input, shape index: {}]
  %s1 = inlined_call_operand.hbm [shape: f32[4,512], index: 1, kind: output, shape index: {}]
  %s2 = sld [smem:[#allocation0]]
  $region18: #{tpu_custom_call.1} parent=0
    _
  %s4 = ssub.s32 1, %s2
  %s5 = scalar_select 0, %s4, %s2
  $region1: #{tpu_custom_call.1} parent=0
    #allocation2 [shape = 'u8[8192]{0}', space=vmem, size = 0x2000, scoped, tag = 'input window, operand 0, single buffered']
    #allocation3 [shape = 's32[1]{0}', space=sflag, size = 0x4, scoped, tag = 'scoped memory for tpu_custom_call.1']
    #allocation4 [shape = 's32[1]{0}', space=sflag, size = 0x4, scoped, tag = 'scoped memory for tpu_custom_call.1']
    #allocation5 [shape = 'u8[8192]{0}', space=vmem, size = 0x2000, scoped, tag = 'output window, operand 0, single buffered']
    %6 = vsyncpa [#allocation3], 0
    %7 = vsyncpa [#allocation4], 0
    // Predicated region
    $region2: #{tpu_custom_call.1} parent=1 // pred_check
      _
    $region3: #{tpu_custom_call.1} parent=1 // pred_check_branch
      %9 = sbr.rel (0) target = $region5
    $region4: #{tpu_custom_call.1} parent=1 // pred_region
      %s11 = ssub.s32 256, 256
      %12 = vsyncadd [#allocation3], %s11
      %s14 = sshll.u32 [#allocation2], 4
      %s15 = int_to_ptr.vmem [resolvable:$true] %s14
      %17 = dma.hbm_to_vmem [thread:$0]  %s0, 256, %s15, [#allocation3]
    $region5: #{tpu_custom_call.1} parent=1 // pred_fallthru
      _
    // Predicated region
    $region6: #{tpu_custom_call.1} parent=1 // pred_check
      _
    $region7: #{tpu_custom_call.1} parent=1 // pred_check_branch
      %19 = sbr.rel (0) target = $region9
    $region8: #{tpu_custom_call.1} parent=1 // pred_region
      %20 = dma.done [#allocation3], 256
    $region9: #{tpu_custom_call.1} parent=1 // pred_fallthru
      _
    %v21 = vld [vmem:[#allocation2] sm:$0xff]
    %v22 = vld [vmem:[#allocation2 + $0x8] sm:$0xff]
    %v23 = vmul.f32 %v21, 0.15707964
    %v24 = vmul.f32 %v22, 0.15707964
    %v25 = vand.u32 2147483647, %v23
    %vm26 = vcmp.le.f32.partialorder %v25, 0.7853982
    %vm27 = vcmp.lt.s32.totalorder %v23, 0
    %v28 = vand.u32 %v23, 2139095040
    %v29 = vshrl.u32 %v28, 23
    %v30 = vsub.s32 %v29, 127
    %v31 = vand.u32 2147483647, %v23
    %v32 = vand.u32 %v31, 8388607
    %v33 = vor.u32 %v32, 8388608
    %v34 = vsub.s32 0, %v33
    %v35 = vadd.s32 %v30, 1
    %vm36 = vcmp.gt.s32.totalorder %v35, 0
    %v37 = vsel %vm36, %v35, 0
    %v38 = vshrl.u32 %v37, 5
    %v39 = vand.u32 %v37, 31
    %v40 = vsub.s32 32, %v39
    %v41 = vshrl.u32 683565275, %v40
    %v42 = vshll.u32 683565275, %v39
    %v43 = vshrl.u32 2475754826, %v40
    %v44 = vor.u32 %v42, %v43
    %v45 = vshll.u32 2475754826, %v39
    %v46 = vshrl.u32 2131351028, %v40
    %v47 = vor.u32 %v45, %v46
    %v48 = vshll.u32 2131351028, %v39
    %v49 = vshrl.u32 2102212464, %v40
    %v50 = vor.u32 %v48, %v49
    %v51 = vshll.u32 2102212464, %v39
    %v52 = vshrl.u32 920167782, %v40
    %v53 = vor.u32 %v51, %v52
    %v54 = vshll.u32 920167782, %v39
    %v55 = vshrl.u32 1326507024, %v40
    %v56 = vor.u32 %v54, %v55
    %vm57 = vcmp.lt.s32.totalorder %v38, 1
    %vm58 = vcmp.lt.s32.totalorder %v38, 2
    %vm59 = vcmp.lt.s32.totalorder %v38, 3
    %vm60 = vcmp.lt.s32.totalorder %v38, 4
    %v61 = vsel %vm57, %v41, %v44
    %v62 = vsel %vm60, %v50, 2102212464
    %v63 = vsel %vm59, %v47, %v62
    %v64 = vsel %vm58, %v61, %v63
    %v65 = vsel %vm57, %v44, %v47
    %v66 = vsel %vm60, %v53, 920167782
    %v67 = vsel %vm59, %v50, %v66
    %v68 = vsel %vm58, %v65, %v67
    %v69 = vsel %vm57, %v47, %v50
    %v70 = vsel %vm60, %v56, 1326507024
    %v71 = vsel %vm59, %v53, %v70
    %v72 = vsel %vm58, %v69, %v71
    %v73 = vshll.u32 %v33, 8
    %v74 = vmul.u32.u64.compose %v73, %v72
    %v75 = vextract.low.u32 %v74
    %v76 = vextract.high.u32 %v74
    %v77 = vmul.u32.u64.compose %v73, %v68
    %v78 = vextract.low.u32 %v77
    %v79 = vextract.high.u32 %v77
    %v80 = vmul.u32 %v73, %v64
    %v81 = vadd.s32 %v76, %v78
    %vm82 = vc.u32 %v76, %v78
    %v83 = vadd.s32 %v79, 1
    %v84 = vsel %vm82, %v83, %v79
    %v85 = vadd.s32 %v80, %v84
    %v86 = vadd.s32 %v85, 536870912
    %v87 = vshrl.u32 %v86, 30
    %v88 = vshll.u32 %v87, 30
    %v89 = vsub.s32 %v85, %v88
    %vm90 = vcmp.lt.s32.totalorder %v89, 0
    %v91 = vsub.s32 0, %v89
    %v92 = vsel %vm90, %v91, %v89
    %v93 = vclz %v92
    %v94 = vsub.s32 %v93, 2
    %vm95 = vcmp.gt.s32.totalorder 0, %v94
    %v96 = vsel %vm95, 0, %v94
    %v97 = vsub.s32 32, %v96
    %v98 = vshll.u32 %v89, %v96
    %v99 = vshrl.u32 %v81, %v97
    %v100 = vor.u32 %v98, %v99
    %v101 = vsub.s32 4294967266, %v96
    %v102 = vadd.s32 %v101, 127
    %v103 = vshll.u32 %v102, 23
    %v104 = vor.u32 4788187, %v103
    %v105 = vand.u32 2147483647, %v104
    %v107 = vcvt.s32.f32 %v100
    %v108 = vmul.f32 %v107, %v105
    %v109 = vxor.u32 %v108, 2147483648
    %v110 = vsel %vm27, %v109, %v108
    %v111 = vsub.s32 4, %v87
    %v112 = vsel %vm27, %v111, %v87
    %v113 = vsel %vm26, %v23, %v110
    %v114 = vsel %vm26, 0, %v112
    %v115 = vcosq.f32.pop %v113
    %v116 = vsinq.f32.pop %v113
    %vm117 = vweird.f32 %v23
    %v118 = vand.u32 %v114, 3
    %vm119 = vcmp.lt.s32.totalorder %v118, 2
    %vm120 = vcmp.eq.s32.totalorder %v118, 0
    %v121 = vxor.u32 %v116, 2147483648
    %v122 = vsel %vm120, %v115, %v121
    %vm123 = vcmp.eq.s32.totalorder %v118, 2
    %v124 = vxor.u32 %v115, 2147483648
    %v125 = vsel %vm123, %v124, %v116
    %v126 = vsel %vm119, %v122, %v125
    %v127 = vsel %vm117, nan, %v126
    %v128 = vand.u32 2147483647, %v24
    %vm129 = vcmp.le.f32.partialorder %v128, 0.7853982
    %vm130 = vcmp.lt.s32.totalorder %v24, 0
    %v131 = vand.u32 %v24, 2139095040
    %v132 = vshrl.u32 %v131, 23
    %v133 = vsub.s32 %v132, 127
    %v134 = vand.u32 2147483647, %v24
    %v135 = vand.u32 %v134, 8388607
    %v136 = vor.u32 %v135, 8388608
    %v137 = vsub.s32 0, %v136
    %v138 = vadd.s32 %v133, 1
    %vm139 = vcmp.gt.s32.totalorder %v138, 0
    %v140 = vsel %vm139, %v138, 0
    %v141 = vshrl.u32 %v140, 5
    %v142 = vand.u32 %v140, 31
    %v143 = vsub.s32 32, %v142
    %v144 = vshrl.u32 683565275, %v143
    %v145 = vshll.u32 683565275, %v142
    %v146 = vshrl.u32 2475754826, %v143
    %v147 = vor.u32 %v145, %v146
    %v148 = vshll.u32 2475754826, %v142
    %v149 = vshrl.u32 2131351028, %v143
    %v150 = vor.u32 %v148, %v149
    %v151 = vshll.u32 2131351028, %v142
    %v152 = vshrl.u32 2102212464, %v143
    %v153 = vor.u32 %v151, %v152
    %v154 = vshll.u32 2102212464, %v142
    %v155 = vshrl.u32 920167782, %v143
    %v156 = vor.u32 %v154, %v155
    %v157 = vshll.u32 920167782, %v142
    %v158 = vshrl.u32 1326507024, %v143
    %v159 = vor.u32 %v157, %v158
    %vm160 = vcmp.lt.s32.totalorder %v141, 1
    %vm161 = vcmp.lt.s32.totalorder %v141, 2
    %vm162 = vcmp.lt.s32.totalorder %v141, 3
    %vm163 = vcmp.lt.s32.totalorder %v141, 4
    %v164 = vsel %vm160, %v144, %v147
    %v165 = vsel %vm163, %v153, 2102212464
    %v166 = vsel %vm162, %v150, %v165
    %v167 = vsel %vm161, %v164, %v166
    %v168 = vsel %vm160, %v147, %v150
    %v169 = vsel %vm163, %v156, 920167782
    %v170 = vsel %vm162, %v153, %v169
    %v171 = vsel %vm161, %v168, %v170
    %v172 = vsel %vm160, %v150, %v153
    %v173 = vsel %vm163, %v159, 1326507024
    %v174 = vsel %vm162, %v156, %v173
    %v175 = vsel %vm161, %v172, %v174
    %v176 = vshll.u32 %v136, 8
    %v177 = vmul.u32.u64.compose %v176, %v175
    %v178 = vextract.low.u32 %v177
    %v179 = vextract.high.u32 %v177
    %v180 = vmul.u32.u64.compose %v176, %v171
    %v181 = vextract.low.u32 %v180
    %v182 = vextract.high.u32 %v180
    %v183 = vmul.u32 %v176, %v167
    %v184 = vadd.s32 %v179, %v181
    %vm185 = vc.u32 %v179, %v181
    %v186 = vadd.s32 %v182, 1
    %v187 = vsel %vm185, %v186, %v182
    %v188 = vadd.s32 %v183, %v187
    %v189 = vadd.s32 %v188, 536870912
    %v190 = vshrl.u32 %v189, 30
    %v191 = vshll.u32 %v190, 30
    %v192 = vsub.s32 %v188, %v191
    %vm193 = vcmp.lt.s32.totalorder %v192, 0
    %v194 = vsub.s32 0, %v192
    %v195 = vsel %vm193, %v194, %v192
    %v196 = vclz %v195
    %v197 = vsub.s32 %v196, 2
    %vm198 = vcmp.gt.s32.totalorder 0, %v197
    %v199 = vsel %vm198, 0, %v197
    %v200 = vsub.s32 32, %v199
    %v201 = vshll.u32 %v192, %v199
    %v202 = vshrl.u32 %v184, %v200
    %v203 = vor.u32 %v201, %v202
    %v204 = vsub.s32 4294967266, %v199
    %v205 = vadd.s32 %v204, 127
    %v206 = vshll.u32 %v205, 23
    %v207 = vor.u32 4788187, %v206
    %v208 = vand.u32 2147483647, %v207
    %v210 = vcvt.s32.f32 %v203
    %v211 = vmul.f32 %v210, %v208
    %v212 = vxor.u32 %v211, 2147483648
    %v213 = vsel %vm130, %v212, %v211
    %v214 = vsub.s32 4, %v190
    %v215 = vsel %vm130, %v214, %v190
    %v216 = vsel %vm129, %v24, %v213
    %v217 = vsel %vm129, 0, %v215
    %v218 = vcosq.f32.pop %v216
    %v219 = vsinq.f32.pop %v216
    %vm220 = vweird.f32 %v24
    %v221 = vand.u32 %v217, 3
    %vm222 = vcmp.lt.s32.totalorder %v221, 2
    %vm223 = vcmp.eq.s32.totalorder %v221, 0
    %v224 = vxor.u32 %v219, 2147483648
    %v225 = vsel %vm223, %v218, %v224
    %vm226 = vcmp.eq.s32.totalorder %v221, 2
    %v227 = vxor.u32 %v218, 2147483648
    %v228 = vsel %vm226, %v227, %v219
    %v229 = vsel %vm222, %v225, %v228
    %v230 = vsel %vm220, nan, %v229
    %v231 = vmul.f32 %v127, %v127
    %v232 = vmul.f32 %v230, %v230
    %vm233 = vcmp.le.f32.partialorder %v21, 10.0
    %vm234 = vcmp.le.f32.partialorder %v22, 10.0
    %v235 = vsel %vm233, %v231, 0.0
    %v236 = vsel %vm234, %v232, 0.0
    %237 = vst [vmem:[#allocation5] sm:$0xff] %v235
    %238 = vst [vmem:[#allocation5 + $0x8] sm:$0xff] %v236
    // Predicated region
    $region10: #{tpu_custom_call.1} parent=1 // pred_check
      _
    $region11: #{tpu_custom_call.1} parent=1 // pred_check_branch
      %240 = sbr.rel (0) target = $region13
    $region12: #{tpu_custom_call.1} parent=1 // pred_region
      %s242 = ssub.s32 256, 256
      %243 = vsyncadd [#allocation4], %s242
      %s245 = sshll.u32 [#allocation5], 4
      %s246 = int_to_ptr.vmem [resolvable:$true] %s245
      %248 = dma.vmem_to_hbm [thread:$0]  %s246, 256, %s1, [#allocation4]
    $region13: #{tpu_custom_call.1} parent=1 // pred_fallthru
      _
    // Predicated region
    $region14: #{tpu_custom_call.1} parent=1 // pred_check
      _
    $region15: #{tpu_custom_call.1} parent=1 // pred_check_branch
      %250 = sbr.rel (0) target = $region17
    $region16: #{tpu_custom_call.1} parent=1 // pred_region
      %251 = dma.done [#allocation4], 256
    $region17: #{tpu_custom_call.1} parent=1 // pred_fallthru
      _
    %252 = vsyncpa [#allocation3], 1
    %253 = vsyncpa [#allocation4], 1

</llo_original>
